<compile_context>
chip_gen: v7x
topology: tpu7x:2x2x1
jax: 0.10.0
libtpu: 0.0.40
codegen_flags: <defaults>
</compile_context>

<pallas_src>
import functools

import jax
import jax.numpy as jnp
from jax.experimental import pallas as pl
from jax.experimental.pallas import tpu as pltpu


def mlp_kernel(x_ref, w1_ref, b1_ref, w2_ref, b2_ref, o_ref):
    # Two MXU matmuls + EUP sigmoids, all operands resident in VMEM.
    x = x_ref[...]                                              # (TB, D_in)
    h = jnp.dot(x, w1_ref[...], preferred_element_type=jnp.float32)
    h = jax.nn.sigmoid(h + b1_ref[...])                         # (TB, Hp)
    y = jnp.dot(h.astype(w2_ref.dtype), w2_ref[...],
                preferred_element_type=jnp.float32)
    o_ref[...] = jax.nn.sigmoid(y + b2_ref[...]).astype(o_ref.dtype)


def _round_up(n, m):
    return pl.cdiv(n, m) * m


def _pad_to(a, target_shape):
    pads = [(0, t - s) for s, t in zip(a.shape, target_shape)]
    if all(p == (0, 0) for p in pads):
        return a
    return jnp.pad(a, pads)


@functools.partial(jax.jit, static_argnames=("block_batch",))
def benchmark_mlp(x, w1, b1, w2, b2, *, block_batch=512):
    """x: (B, D_in), w1: (D_in, H), b1: (1, H), w2: (H, O), b2: (1, O)."""
    B, D_in = x.shape
    H = w1.shape[1]
    O = w2.shape[1]

    # Lane-dense padding: H and O -> multiples of 128.
    Hp = _round_up(H, 128)
    Op = _round_up(O, 128)

    # Batch tile: multiple of 8 sublanes, capped at block_batch rows.
    TB = min(block_batch, _round_up(B, 8))
    Bp = _round_up(B, TB)
    n_tiles = Bp // TB

    # Zero-padding is semantics-preserving (padded W2 rows are zero, so the
    # sigmoid(0)=0.5 in padded hidden columns contributes nothing).
    xp = _pad_to(x, (Bp, D_in))
    w1p = _pad_to(w1, (D_in, Hp))
    b1p = _pad_to(b1, (1, Hp))
    w2p = _pad_to(w2, (Hp, Op))
    b2p = _pad_to(b2, (1, Op))

    out_padded = pl.pallas_call(
        mlp_kernel,
        out_shape=jax.ShapeDtypeStruct((Bp, Op), x.dtype),
        grid_spec=pltpu.PrefetchScalarGridSpec(
            num_scalar_prefetch=0,
            grid=(n_tiles,),
            in_specs=[
                # Batch-tiled activations stream through the pipeline.
                pl.BlockSpec((TB, D_in), lambda i: (i, 0)),
                # Weights / biases: constant block index -> fetched once,
                # VMEM-resident across all batch tiles.
                pl.BlockSpec((D_in, Hp), lambda i: (0, 0)),
                pl.BlockSpec((1, Hp), lambda i: (0, 0)),
                pl.BlockSpec((Hp, Op), lambda i: (0, 0)),
                pl.BlockSpec((1, Op), lambda i: (0, 0)),
            ],
            out_specs=pl.BlockSpec((TB, Op), lambda i: (i, 0)),
        ),
        compiler_params=pltpu.CompilerParams(
            # Batch tiles are independent -> shard across TensorCores on v7x.
            dimension_semantics=("parallel",),
        ),
    )(xp, w1p, b1p, w2p, b2p)

    # Strip batch / output-lane padding.
    return out_padded[:B, :O]


def reference_mlp(x, w1, b1, w2, b2):
    h = jax.nn.sigmoid(x @ w1 + b1)
    return jax.nn.sigmoid(h @ w2 + b2)


if __name__ == "__main__":
    # Small shapes consistent with the module's forward:
    #   input_size=32, mlp_hidden_size=64, out_size=16, batch=8
    batch, input_size, hidden_size, out_size = 8, 32, 64, 16

    key = jax.random.PRNGKey(0)
    kx, kw1, kb1, kw2, kb2 = jax.random.split(key, 5)

    x = jax.random.normal(kx, (batch, input_size), dtype=jnp.float32)

    # Deterministic param init (PyTorch-Linear-like uniform(-1/sqrt(fan_in), +)).
    lim1 = 1.0 / (input_size ** 0.5)
    w1 = jax.random.uniform(kw1, (input_size, hidden_size), jnp.float32, -lim1, lim1)
    b1 = jax.random.uniform(kb1, (1, hidden_size), jnp.float32, -lim1, lim1)
    lim2 = 1.0 / (hidden_size ** 0.5)
    w2 = jax.random.uniform(kw2, (hidden_size, out_size), jnp.float32, -lim2, lim2)
    b2 = jax.random.uniform(kb2, (1, out_size), jnp.float32, -lim2, lim2)

    out = benchmark_mlp(x, w1, b1, w2, b2)
    out = jax.block_until_ready(out)

    ref = reference_mlp(x, w1, b1, w2, b2)
    assert out.shape == (batch, out_size)
    assert jnp.allclose(out, ref, atol=1e-5, rtol=1e-5)

    print("KERNEL_OK")
</pallas_src>

<mosaic_0001>
module attributes {stable_mosaic.version = 11 : i64} {
  func.func @mlp_kernel(%arg0: i32, %arg1: memref<8x32xf32, #tpu.memory_space<vmem>>, %arg2: memref<32x128xf32, #tpu.memory_space<vmem>>, %arg3: memref<1x128xf32, #tpu.memory_space<vmem>>, %arg4: memref<128x128xf32, #tpu.memory_space<vmem>>, %arg5: memref<1x128xf32, #tpu.memory_space<vmem>>, %arg6: memref<8x128xf32, #tpu.memory_space<vmem>>) attributes {dimension_semantics = [#tpu.dimension_semantics<parallel>], iteration_bounds = array<i64: 1>, scalar_prefetch = 0 : i64, scratch_operands = 0 : i64, tpu.core_type = #tpu.core_type<tc>, window_params = [{transform_indices = @transform_0, window_bounds = array<i64: 8, 32>}, {pipeline_mode = #tpu.pipeline_mode<synchronous>, transform_indices = @transform_1, window_bounds = array<i64: 32, 128>}, {pipeline_mode = #tpu.pipeline_mode<synchronous>, transform_indices = @transform_2, window_bounds = array<i64: 1, 128>}, {pipeline_mode = #tpu.pipeline_mode<synchronous>, transform_indices = @transform_3, window_bounds = array<i64: 128, 128>}, {pipeline_mode = #tpu.pipeline_mode<synchronous>, transform_indices = @transform_4, window_bounds = array<i64: 1, 128>}, {transform_indices = @transform_5, window_bounds = array<i64: 8, 128>}]} {
    %c0 = arith.constant 0 : index
    %c0_0 = arith.constant 0 : index
    %0 = vector.load %arg1[%c0, %c0_0] : memref<8x32xf32, #tpu.memory_space<vmem>>, vector<8x32xf32>
    %c0_1 = arith.constant 0 : index
    %c0_2 = arith.constant 0 : index
    %1 = vector.load %arg2[%c0_1, %c0_2] : memref<32x128xf32, #tpu.memory_space<vmem>>, vector<32x128xf32>
    %cst = arith.constant dense<0.000000e+00> : vector<8x128xf32>
    %2 = tpu.matmul %0, %1, %cst {dimension_numbers = #tpu.dot_dimension_numbers<[1], [0], [0], [1], [0, 0, 1, 1], [], []>} : vector<8x32xf32>, vector<32x128xf32>, vector<8x128xf32> -> vector<8x128xf32>
    %c0_3 = arith.constant 0 : index
    %c0_4 = arith.constant 0 : index
    %3 = vector.load %arg3[%c0_3, %c0_4] : memref<1x128xf32, #tpu.memory_space<vmem>>, vector<1x128xf32>
    %4 = vector.broadcast %3 : vector<1x128xf32> to vector<8x128xf32>
    %5 = arith.addf %2, %4 : vector<8x128xf32>
    %6 = arith.negf %5 : vector<8x128xf32>
    %7 = math.exp %6 : vector<8x128xf32>
    %cst_5 = arith.constant 1.000000e+00 : f32
    %8 = vector.broadcast %cst_5 : f32 to vector<8x128xf32>
    %9 = arith.addf %8, %7 : vector<8x128xf32>
    %10 = arith.divf %8, %9 : vector<8x128xf32>
    %c0_6 = arith.constant 0 : index
    %c0_7 = arith.constant 0 : index
    %11 = vector.load %arg4[%c0_6, %c0_7] : memref<128x128xf32, #tpu.memory_space<vmem>>, vector<128x128xf32>
    %cst_8 = arith.constant dense<0.000000e+00> : vector<8x128xf32>
    %12 = tpu.matmul %10, %11, %cst_8 {dimension_numbers = #tpu.dot_dimension_numbers<[1], [0], [0], [1], [0, 0, 1, 1], [], []>} : vector<8x128xf32>, vector<128x128xf32>, vector<8x128xf32> -> vector<8x128xf32>
    %c0_9 = arith.constant 0 : index
    %c0_10 = arith.constant 0 : index
    %13 = vector.load %arg5[%c0_9, %c0_10] : memref<1x128xf32, #tpu.memory_space<vmem>>, vector<1x128xf32>
    %14 = vector.broadcast %13 : vector<1x128xf32> to vector<8x128xf32>
    %15 = arith.addf %12, %14 : vector<8x128xf32>
    %16 = arith.negf %15 : vector<8x128xf32>
    %17 = math.exp %16 : vector<8x128xf32>
    %cst_11 = arith.constant 1.000000e+00 : f32
    %18 = vector.broadcast %cst_11 : f32 to vector<8x128xf32>
    %19 = arith.addf %18, %17 : vector<8x128xf32>
    %20 = arith.divf %18, %19 : vector<8x128xf32>
    %c0_12 = arith.constant 0 : index
    %c0_13 = arith.constant 0 : index
    %21 = vector.load %arg6[%c0_12, %c0_13] : memref<8x128xf32, #tpu.memory_space<vmem>>, vector<8x128xf32>
    tpu.vector_store %arg6[%c0_12, %c0_13], %20 {strides = array<i32>} : memref<8x128xf32, #tpu.memory_space<vmem>>, vector<8x128xf32>,
    return
  }
  func.func @transform_0(%arg0: i32) -> (i32, i32) {
    %c0_i32 = arith.constant 0 : i32
    %c0_i32_0 = arith.constant 0 : i32
    return %arg0, %c0_i32 : i32, i32
  }
  func.func @transform_1(%arg0: i32) -> (i32, i32) {
    %c0_i32 = arith.constant 0 : i32
    %c0_i32_0 = arith.constant 0 : i32
    %c0_i32_1 = arith.constant 0 : i32
    return %c0_i32, %c0_i32_0 : i32, i32
  }
  func.func @transform_2(%arg0: i32) -> (i32, i32) {
    %c0_i32 = arith.constant 0 : i32
    %c0_i32_0 = arith.constant 0 : i32
    %c0_i32_1 = arith.constant 0 : i32
    return %c0_i32, %c0_i32_0 : i32, i32
  }
  func.func @transform_3(%arg0: i32) -> (i32, i32) {
    %c0_i32 = arith.constant 0 : i32
    %c0_i32_0 = arith.constant 0 : i32
    %c0_i32_1 = arith.constant 0 : i32
    return %c0_i32, %c0_i32_0 : i32, i32
  }
  func.func @transform_4(%arg0: i32) -> (i32, i32) {
    %c0_i32 = arith.constant 0 : i32
    %c0_i32_0 = arith.constant 0 : i32
    %c0_i32_1 = arith.constant 0 : i32
    return %c0_i32, %c0_i32_0 : i32, i32
  }
  func.func @transform_5(%arg0: i32) -> (i32, i32) {
    %c0_i32 = arith.constant 0 : i32
    %c0_i32_0 = arith.constant 0 : i32
    return %arg0, %c0_i32 : i32, i32
  }
}

</mosaic_0001>

<llo_original>
// kernel: benchmark_mlp.1
$region0: #{benchmark_mlp.1}
  #allocation0 [shape = 'u32[]', space=smem, size = 0x4, offset = 0x4, fixed_abs, tag = 'smem constant byte address 0x4 - core index']
  #allocation1 [shape = 'u32[144,128]{1,0:T(1,128)}', space=vmem, size = 0x12000, scoped, tag = 'internal scratch']
  %s0 = inlined_call_operand.vmem [shape: f32[8,32], index: 0, kind: input, shape index: {}]
  %s1 = inlined_call_operand.vmem [shape: f32[32,128], index: 1, kind: input, shape index: {}]
  %s2 = inlined_call_operand.vmem [shape: f32[1,128], index: 2, kind: input, shape index: {}]
  %s3 = inlined_call_operand.vmem [shape: f32[128,128], index: 3, kind: input, shape index: {}]
  %s4 = inlined_call_operand.vmem [shape: f32[1,128], index: 4, kind: input, shape index: {}]
  %s5 = inlined_call_operand.hbm [shape: f32[8,128], index: 5, kind: output, shape index: {}]
  %s6 = sld [smem:[#allocation0]]
  $region30: #{benchmark_mlp.1} parent=0
    _
  %s8 = ssub.s32 1, %s6
  %s9 = scalar_select 0, %s8, %s6
  $region1: #{benchmark_mlp.1} parent=0
    #allocation2 [shape = 'u8[4096]{0}', space=vmem, size = 0x1000, scoped, tag = 'output window, operand 0, single buffered']
    #allocation3 [shape = 's32[1]{0}', space=sflag, size = 0x4, scoped, tag = 'scoped memory for benchmark_mlp.1']
    %10 = vsyncpa [#allocation3], 0
    // Predicated region
    $region2: #{benchmark_mlp.1} parent=1 // pred_check
      _
    $region3: #{benchmark_mlp.1} parent=1 // pred_check_branch
      %12 = sbr.rel (0) target = $region5
    $region4: #{benchmark_mlp.1} parent=1 // pred_region
      _
    $region5: #{benchmark_mlp.1} parent=1 // pred_fallthru
      _
    // Predicated region
    $region6: #{benchmark_mlp.1} parent=1 // pred_check
      _
    $region7: #{benchmark_mlp.1} parent=1 // pred_check_branch
      %14 = sbr.rel (0) target = $region9
    $region8: #{benchmark_mlp.1} parent=1 // pred_region
      _
    $region9: #{benchmark_mlp.1} parent=1 // pred_fallthru
      _
    // Predicated region
    $region10: #{benchmark_mlp.1} parent=1 // pred_check
      _
    $region11: #{benchmark_mlp.1} parent=1 // pred_check_branch
      %16 = sbr.rel (0) target = $region13
    $region12: #{benchmark_mlp.1} parent=1 // pred_region
      _
    $region13: #{benchmark_mlp.1} parent=1 // pred_fallthru
      _
    // Predicated region
    $region14: #{benchmark_mlp.1} parent=1 // pred_check
      _
    $region15: #{benchmark_mlp.1} parent=1 // pred_check_branch
      %18 = sbr.rel (0) target = $region17
    $region16: #{benchmark_mlp.1} parent=1 // pred_region
      _
    $region17: #{benchmark_mlp.1} parent=1 // pred_fallthru
      _
    // Predicated region
    $region18: #{benchmark_mlp.1} parent=1 // pred_check
      _
    $region19: #{benchmark_mlp.1} parent=1 // pred_check_branch
      %20 = sbr.rel (0) target = $region21
    $region20: #{benchmark_mlp.1} parent=1 // pred_region
      _
    $region21: #{benchmark_mlp.1} parent=1 // pred_fallthru
      _
    %v21 = vld [vmem:[%s0] sm:$0xff]
    %v22 = vld [vmem:[%s1] sm:$0xff]
    %v23 = vld [vmem:[%s1 + $0x8] sm:$0xff]
    %v24 = vld [vmem:[%s1 + $0x10] sm:$0xff]
    %v25 = vld [vmem:[%s1 + $0x18] sm:$0xff]
    %v26 = vld [vmem:[%s2] sm:$0x1]
    %v28 = vlaneseq
    %v29 = vshrl.u32 %v28, 7
    %v30 = vsub.s32 0, %v29
    %v31 = vrot.slane %v26, %v30
    %vm33 = vcmask 261120
    %v35 = vsel %vm33, %v21, 0
    %37 = vmatprep.subr.mxu0 0.0
    %38 = vmatpush1.msra.mxu0 %v22
    %39 = vmatprep.subr.mxu0 0.0
    %40 = vmatpush1.msra.mxu0 %v23
    %41 = vmatprep.subr.mxu0 0.0
    %42 = vmatpush1.msra.mxu0 %v24
    %43 = vmatprep.subr.mxu0 0.0
    %44 = vmatpush1.msra.mxu0 %v25
    %45 = vmatprep.subr.mxu0 0.0
    %46 = vmatpush1.msra.mxu0 0.0
    %47 = vmatprep.subr.mxu0 0.0
    %48 = vmatpush1.msra.mxu0 0.0
    %49 = vmatprep.subr.mxu0 0.0
    %50 = vmatpush1.msra.mxu0 0.0
    %51 = vmatprep.subr.mxu0 0.0
    %52 = vmatpush1.msra.mxu0 0.0
    %53 = vmatprep.subr.mxu0 0.0
    %54 = vmatpush1.msra.mxu0 0.0
    %55 = vmatprep.subr.mxu0 0.0
    %56 = vmatpush1.msra.mxu0 0.0
    %57 = vmatprep.subr.mxu0 0.0
    %58 = vmatpush1.msra.mxu0 0.0
    %59 = vmatprep.subr.mxu0 0.0
    %60 = vmatpush1.msra.mxu0 0.0
    %61 = vmatprep.subr.mxu0 0.0
    %62 = vmatpush1.msra.mxu0 0.0
    %63 = vmatprep.subr.mxu0 0.0
    %64 = vmatpush1.msra.mxu0 0.0
    %65 = vmatprep.subr.mxu0 0.0
    %66 = vmatpush1.msra.mxu0 0.0
    %67 = vmatprep.subr.mxu0 0.0
    %68 = vmatpush1.msra.mxu0 0.0
    %69 = vmatprep.subr.mxu0 0.0
    %70 = vmatpush1.msra.mxu0 0.0
    %71 = vmatprep.subr.mxu0 0.0
    %72 = vmatpush1.msra.mxu0 0.0
    %73 = vmatprep.subr.mxu0 0.0
    %74 = vmatpush1.msra.mxu0 0.0
    %75 = vmatprep.subr.mxu0 0.0
    %76 = vmatpush1.msra.mxu0 0.0
    %77 = vmatprep.subr.mxu0 0.0
    %78 = vmatpush1.msra.mxu0 0.0
    %79 = vmatprep.subr.mxu0 0.0
    %80 = vmatpush1.msra.mxu0 0.0
    %81 = vmatprep.subr.mxu0 0.0
    %82 = vmatpush1.msra.mxu0 0.0
    %83 = vmatprep.subr.mxu0 0.0
    %84 = vmatpush1.msra.mxu0 0.0
    %85 = vmatprep.subr.mxu0 0.0
    %86 = vmatpush1.msra.mxu0 0.0
    %87 = vmatprep.subr.mxu0 0.0
    %88 = vmatpush1.msra.mxu0 0.0
    %89 = vmatprep.subr.mxu0 0.0
    %90 = vmatpush1.msra.mxu0 0.0
    %91 = vmatprep.subr.mxu0 0.0
    %92 = vmatpush1.msra.mxu0 0.0
    %93 = vmatprep.subr.mxu0 0.0
    %94 = vmatpush1.msra.mxu0 0.0
    %95 = vmatprep.subr.mxu0 0.0
    %96 = vmatpush1.msra.mxu0 0.0
    %97 = vmatprep.subr.mxu0 0.0
    %98 = vmatpush1.msra.mxu0 0.0
    %99 = vmatprep.subr.mxu0 0.0
    %100 = vmatpush1.msra.mxu0 0.0
    %101 = vmatprep.mubr.f32.mxu0 0.0
    %102 = vmatmul.mubr.f32.gmra.mrb[0].mxu0 %v35
    %v103 = vpop.f32.mrb[0].mxu0
    %v104 = vadd.f32 %v31, %v103
    %v105 = vpop.f32.mrb[0].mxu0
    %106 = vdwg.mxu0
    %v107 = vxor.u32 %v104, 2147483648
    %v108 = vmul.f32 %v107, 1.442695
    %v109 = vpow.pop %v108
    %v110 = vadd.f32 %v109, 1.0
    %v111 = vrcp.pop %v110
    %v112 = vmul.f32 1.0, %v111
    %v113 = vld [vmem:[%s3] sm:$0xff]
    %v114 = vld [vmem:[%s3 + $0x8] sm:$0xff]
    %v115 = vld [vmem:[%s3 + $0x10] sm:$0xff]
    %v116 = vld [vmem:[%s3 + $0x18] sm:$0xff]
    %v117 = vld [vmem:[%s3 + $0x20] sm:$0xff]
    %v118 = vld [vmem:[%s3 + $0x28] sm:$0xff]
    %v119 = vld [vmem:[%s3 + $0x30] sm:$0xff]
    %v120 = vld [vmem:[%s3 + $0x38] sm:$0xff]
    %v121 = vld [vmem:[%s3 + $0x40] sm:$0xff]
    %v122 = vld [vmem:[%s3 + $0x48] sm:$0xff]
    %v123 = vld [vmem:[%s3 + $0x50] sm:$0xff]
    %v124 = vld [vmem:[%s3 + $0x58] sm:$0xff]
    %v125 = vld [vmem:[%s3 + $0x60] sm:$0xff]
    %v126 = vld [vmem:[%s3 + $0x68] sm:$0xff]
    %v127 = vld [vmem:[%s3 + $0x70] sm:$0xff]
    %v128 = vld [vmem:[%s3 + $0x78] sm:$0xff]
    %v129 = vld [vmem:[%s4] sm:$0x1]
    %v131 = vlaneseq
    %v132 = vshrl.u32 %v131, 7
    %v133 = vsub.s32 0, %v132
    %v134 = vrot.slane %v129, %v133
    %136 = vmatprep.subr.mxu0 0.0
    %137 = vmatpush1.msra.mxu0 %v113
    %138 = vmatprep.subr.mxu0 0.0
    %139 = vmatpush1.msra.mxu0 %v114
    %140 = vmatprep.subr.mxu0 0.0
    %141 = vmatpush1.msra.mxu0 %v115
    %142 = vmatprep.subr.mxu0 0.0
    %143 = vmatpush1.msra.mxu0 %v116
    %144 = vmatprep.subr.mxu0 0.0
    %145 = vmatpush1.msra.mxu0 %v117
    %146 = vmatprep.subr.mxu0 0.0
    %147 = vmatpush1.msra.mxu0 %v118
    %148 = vmatprep.subr.mxu0 0.0
    %149 = vmatpush1.msra.mxu0 %v119
    %150 = vmatprep.subr.mxu0 0.0
    %151 = vmatpush1.msra.mxu0 %v120
    %152 = vmatprep.subr.mxu0 0.0
    %153 = vmatpush1.msra.mxu0 %v121
    %154 = vmatprep.subr.mxu0 0.0
    %155 = vmatpush1.msra.mxu0 %v122
    %156 = vmatprep.subr.mxu0 0.0
    %157 = vmatpush1.msra.mxu0 %v123
    %158 = vmatprep.subr.mxu0 0.0
    %159 = vmatpush1.msra.mxu0 %v124
    %160 = vmatprep.subr.mxu0 0.0
    %161 = vmatpush1.msra.mxu0 %v125
    %162 = vmatprep.subr.mxu0 0.0
    %163 = vmatpush1.msra.mxu0 %v126
    %164 = vmatprep.subr.mxu0 0.0
    %165 = vmatpush1.msra.mxu0 %v127
    %166 = vmatprep.subr.mxu0 0.0
    %167 = vmatpush1.msra.mxu0 %v128
    %168 = vmatprep.subr.mxu0 0.0
    %169 = vmatpush1.msra.mxu0 0.0
    %170 = vmatprep.subr.mxu0 0.0
    %171 = vmatpush1.msra.mxu0 0.0
    %172 = vmatprep.subr.mxu0 0.0
    %173 = vmatpush1.msra.mxu0 0.0
    %174 = vmatprep.subr.mxu0 0.0
    %175 = vmatpush1.msra.mxu0 0.0
    %176 = vmatprep.subr.mxu0 0.0
    %177 = vmatpush1.msra.mxu0 0.0
    %178 = vmatprep.subr.mxu0 0.0
    %179 = vmatpush1.msra.mxu0 0.0
    %180 = vmatprep.subr.mxu0 0.0
    %181 = vmatpush1.msra.mxu0 0.0
    %182 = vmatprep.subr.mxu0 0.0
    %183 = vmatpush1.msra.mxu0 0.0
    %184 = vmatprep.subr.mxu0 0.0
    %185 = vmatpush1.msra.mxu0 0.0
    %186 = vmatprep.subr.mxu0 0.0
    %187 = vmatpush1.msra.mxu0 0.0
    %188 = vmatprep.subr.mxu0 0.0
    %189 = vmatpush1.msra.mxu0 0.0
    %190 = vmatprep.subr.mxu0 0.0
    %191 = vmatpush1.msra.mxu0 0.0
    %192 = vmatprep.subr.mxu0 0.0
    %193 = vmatpush1.msra.mxu0 0.0
    %194 = vmatprep.subr.mxu0 0.0
    %195 = vmatpush1.msra.mxu0 0.0
    %196 = vmatprep.subr.mxu0 0.0
    %197 = vmatpush1.msra.mxu0 0.0
    %198 = vmatprep.subr.mxu0 0.0
    %199 = vmatpush1.msra.mxu0 0.0
    %200 = vmatprep.mubr.f32.mxu0 0.0
    %201 = vmatmul.mubr.f32.gmra.mrb[0].mxu0 %v112
    %v202 = vpop.f32.mrb[0].mxu0
    %v203 = vadd.f32 %v134, %v202
    %v204 = vpop.f32.mrb[0].mxu0
    %205 = vdwg.mxu0
    %v206 = vxor.u32 %v203, 2147483648
    %v207 = vmul.f32 %v206, 1.442695
    %v208 = vpow.pop %v207
    %v209 = vadd.f32 %v208, 1.0
    %v210 = vrcp.pop %v209
    %v211 = vmul.f32 1.0, %v210
    %212 = vst [vmem:[#allocation2] sm:$0xff] %v211
    // Predicated region
    $region22: #{benchmark_mlp.1} parent=1 // pred_check
      _
    $region23: #{benchmark_mlp.1} parent=1 // pred_check_branch
      %214 = sbr.rel (0) target = $region25
    $region24: #{benchmark_mlp.1} parent=1 // pred_region
      %s216 = ssub.s32 128, 128
      %217 = vsyncadd [#allocation3], %s216
      %s219 = sshll.u32 [#allocation2], 4
      %s220 = int_to_ptr.vmem [resolvable:$true] %s219
      %222 = dma.vmem_to_hbm [thread:$0]  %s220, 128, %s5, [#allocation3]
    $region25: #{benchmark_mlp.1} parent=1 // pred_fallthru
      _
    // Predicated region
    $region26: #{benchmark_mlp.1} parent=1 // pred_check
      _
    $region27: #{benchmark_mlp.1} parent=1 // pred_check_branch
      %224 = sbr.rel (0) target = $region29
    $region28: #{benchmark_mlp.1} parent=1 // pred_region
      %225 = dma.done [#allocation3], 128
    $region29: #{benchmark_mlp.1} parent=1 // pred_fallthru
      _
    %226 = vsyncpa [#allocation3], 1

</llo_original>
